<compile_context>
chip_gen: v7x
topology: tpu7x:2x2x1
jax: 0.10.0
libtpu: 0.0.40
codegen_flags: <defaults>
</compile_context>

<pallas_src>
import functools

import jax
import jax.numpy as jnp
from jax.experimental import pallas as pl
from jax.experimental.pallas import tpu as pltpu

D = 300        # feature size fixed by the module (Linear(300, 300))
MAX_TM = 1024  # rows per tile; per-tile buffers stay far below the scoped-VMEM limit


def _elem_kernel(x_ref, w0_ref, b0_ref, w1_ref, b1_ref, out_ref):
    # fc0 + ReLU: bf16 operands on the MXU, f32 accumulation / elementwise.
    xb = x_ref[...].astype(jnp.bfloat16)
    h = jnp.dot(xb, w0_ref[...], preferred_element_type=jnp.float32)
    h = jnp.maximum(h + b0_ref[...], 0.0)
    # fc1
    y = jnp.dot(h.astype(jnp.bfloat16), w1_ref[...],
                preferred_element_type=jnp.float32)
    out_ref[...] = y + b1_ref[...]


def _pool_kernel(x_ref, w0_ref, b0_ref, w1_ref, b1_ref, out_ref, acc_ref,
                 *, n_valid, tm):
    i = pl.program_id(0)

    @pl.when(i == 0)
    def _():
        acc_ref[...] = jnp.zeros_like(acc_ref)

    xb = x_ref[...].astype(jnp.bfloat16)
    h = jnp.dot(xb, w0_ref[...], preferred_element_type=jnp.float32)
    h = jnp.maximum(h + b0_ref[...], 0.0)

    # Mask rows past the true set size: the last (edge) tile may contain garbage rows,
    # and relu(garbage) must not pollute the running sum.  jnp.where is a select, so
    # NaN/Inf in masked rows do not propagate.
    row = jax.lax.broadcasted_iota(jnp.int32, h.shape, 0) + i * tm
    h = jnp.where(row < n_valid, h, 0.0)

    # Running SUM over the set axis in a (1, 300) f32 scratch.
    acc_ref[...] += jnp.sum(h, axis=0, keepdims=True)

    @pl.when(i == pl.num_programs(0) - 1)
    def _():
        # mean(h @ W1 + b1, axis=0) == mean(h, axis=0) @ W1 + b1  (linearity),
        # so fc1 shrinks from (N,300)x(300,300) to (1,300)x(300,300).
        s = acc_ref[...] * (1.0 / n_valid)
        y = jnp.dot(s.astype(jnp.bfloat16), w1_ref[...],
                    preferred_element_type=jnp.float32)
        out_ref[...] = y + b1_ref[...]


def deepsets_forward(x, w0, b0, w1, b1, flag):
    """x: (N, 300) f32.  Weights are (in, out) so y = x @ W + b (== PyTorch x @ W.T + b).
    Returns (N, 300) if flag is False, else the mean-pooled (300,)."""
    n = x.shape[0]

    # Tile size along the set axis: multiple of 8 sublanes, capped at MAX_TM.
    tm = min(MAX_TM, pl.cdiv(n, 8) * 8)
    grid = (pl.cdiv(n, tm),)

    # Weights/biases are tiny; cast weights once to bf16 (MXU operands), keep biases f32.
    w0b = w0.astype(jnp.bfloat16)
    w1b = w1.astype(jnp.bfloat16)
    b0r = b0.reshape(1, D)
    b1r = b1.reshape(1, D)

    resident = lambda shape: pl.BlockSpec(shape, lambda i: (0, 0))
    x_spec = pl.BlockSpec((tm, D), lambda i: (i, 0))

    in_specs = [
        x_spec,               # x: tiled over the set axis (f32, cast in-kernel)
        resident((D, D)),     # w0: VMEM-resident across iterations
        resident((1, D)),     # b0
        resident((D, D)),     # w1
        resident((1, D)),     # b1
    ]

    flops = 4 * n * D * D  # two matmuls
    bytes_accessed = (x.size * 4 + w0b.size * 2 + w1b.size * 2
                      + (b0r.size + b1r.size) * 4
                      + (D * 4 if flag else n * D * 4))
    cost = pl.CostEstimate(flops=flops, transcendentals=0,
                           bytes_accessed=bytes_accessed)

    if flag:
        out = pl.pallas_call(
            functools.partial(_pool_kernel, n_valid=n, tm=tm),
            out_shape=jax.ShapeDtypeStruct((1, D), jnp.float32),
            grid=grid,
            in_specs=in_specs,
            out_specs=resident((1, D)),
            scratch_shapes=[pltpu.VMEM((1, D), jnp.float32)],
            compiler_params=pltpu.CompilerParams(
                dimension_semantics=("arbitrary",)),  # reduction over the grid
            cost_estimate=cost,
        )(x, w0b, b0r, w1b, b1r)
        return out[0]

    out = pl.pallas_call(
        _elem_kernel,
        out_shape=jax.ShapeDtypeStruct((n, D), jnp.float32),
        grid=grid,
        in_specs=in_specs,
        out_specs=x_spec,
        compiler_params=pltpu.CompilerParams(
            dimension_semantics=("parallel",)),       # independent tiles (2 TCs on v7x)
        cost_estimate=cost,
    )(x, w0b, b0r, w1b, b1r)
    return out


def init_params(key):
    """Deterministic PyTorch-Linear-style init: U(-1/sqrt(in), 1/sqrt(in))."""
    k0, k1, k2, k3 = jax.random.split(key, 4)
    bound = 1.0 / jnp.sqrt(jnp.float32(D))
    w0 = jax.random.uniform(k0, (D, D), jnp.float32, -bound, bound)
    b0 = jax.random.uniform(k1, (D,), jnp.float32, -bound, bound)
    w1 = jax.random.uniform(k2, (D, D), jnp.float32, -bound, bound)
    b1 = jax.random.uniform(k3, (D,), jnp.float32, -bound, bound)
    return w0, b0, w1, b1


def reference_forward(x, w0, b0, w1, b1, flag):
    h = jnp.maximum(x @ w0 + b0, 0.0)
    y = h @ w1 + b1
    if flag:
        y = jnp.mean(y, axis=0)
    return y


if __name__ == "__main__":
    key = jax.random.PRNGKey(0)
    kx, kx2, kp = jax.random.split(key, 3)
    w0, b0, w1, b1 = init_params(kp)

    # bf16 matmul operands -> looser tolerance than a pure-f32 reference.
    ATOL = RTOL = 3e-2

    # Small set (N=16): single tile, exercises both flag paths.
    N = 16
    x = jax.random.normal(kx, (N, D), jnp.float32)

    y_noflag = jax.block_until_ready(deepsets_forward(x, w0, b0, w1, b1, flag=False))
    ref_noflag = reference_forward(x, w0, b0, w1, b1, flag=False)
    assert y_noflag.shape == (N, D)
    assert jnp.allclose(y_noflag, ref_noflag, atol=ATOL, rtol=RTOL)

    y_flag = jax.block_until_ready(deepsets_forward(x, w0, b0, w1, b1, flag=True))
    ref_flag = reference_forward(x, w0, b0, w1, b1, flag=True)
    assert y_flag.shape == (D,)
    assert jnp.allclose(y_flag, ref_flag, atol=ATOL, rtol=RTOL)

    # Larger set (N=2500): multi-tile grid with a partial edge tile, exercising
    # Pallas edge-block write masking and the pooled-path row masking.
    N2 = 2500
    x2 = jax.random.normal(kx2, (N2, D), jnp.float32)

    y2_noflag = jax.block_until_ready(deepsets_forward(x2, w0, b0, w1, b1, flag=False))
    ref2_noflag = reference_forward(x2, w0, b0, w1, b1, flag=False)
    assert y2_noflag.shape == (N2, D)
    assert jnp.allclose(y2_noflag, ref2_noflag, atol=ATOL, rtol=RTOL)

    y2_flag = jax.block_until_ready(deepsets_forward(x2, w0, b0, w1, b1, flag=True))
    ref2_flag = reference_forward(x2, w0, b0, w1, b1, flag=True)
    assert y2_flag.shape == (D,)
    assert jnp.allclose(y2_flag, ref2_flag, atol=ATOL, rtol=RTOL)

    print("KERNEL_OK")
</pallas_src>

<mosaic_0001>
module attributes {stable_mosaic.version = 11 : i64} {
  func.func @_elem_kernel(%arg0: i32, %arg1: memref<16x300xf32, #tpu.memory_space<vmem>>, %arg2: memref<300x300xbf16, #tpu.memory_space<vmem>>, %arg3: memref<1x300xf32, #tpu.memory_space<vmem>>, %arg4: memref<300x300xbf16, #tpu.memory_space<vmem>>, %arg5: memref<1x300xf32, #tpu.memory_space<vmem>>, %arg6: memref<16x300xf32, #tpu.memory_space<vmem>>) attributes {dimension_semantics = [#tpu.dimension_semantics<parallel>], iteration_bounds = array<i64: 1>, scalar_prefetch = 0 : i64, scratch_operands = 0 : i64, tpu.core_type = #tpu.core_type<tc>, window_params = [{transform_indices = @transform_0, window_bounds = array<i64: 16, 300>}, {pipeline_mode = #tpu.pipeline_mode<synchronous>, transform_indices = @transform_1, window_bounds = array<i64: 300, 300>}, {pipeline_mode = #tpu.pipeline_mode<synchronous>, transform_indices = @transform_2, window_bounds = array<i64: 1, 300>}, {pipeline_mode = #tpu.pipeline_mode<synchronous>, transform_indices = @transform_3, window_bounds = array<i64: 300, 300>}, {pipeline_mode = #tpu.pipeline_mode<synchronous>, transform_indices = @transform_4, window_bounds = array<i64: 1, 300>}, {transform_indices = @transform_5, window_bounds = array<i64: 16, 300>}]} {
    %c0 = arith.constant 0 : index
    %c0_0 = arith.constant 0 : index
    %0 = vector.load %arg1[%c0, %c0_0] : memref<16x300xf32, #tpu.memory_space<vmem>>, vector<16x300xf32>
    %1 = arith.truncf %0 : vector<16x300xf32> to vector<16x300xbf16>
    %c0_1 = arith.constant 0 : index
    %c0_2 = arith.constant 0 : index
    %2 = vector.load %arg2[%c0_1, %c0_2] : memref<300x300xbf16, #tpu.memory_space<vmem>>, vector<300x300xbf16>
    %cst = arith.constant dense<0.000000e+00> : vector<16x300xf32>
    %3 = tpu.matmul %1, %2, %cst {dimension_numbers = #tpu.dot_dimension_numbers<[1], [0], [0], [1], [0, 0, 1, 1], [], []>} : vector<16x300xbf16>, vector<300x300xbf16>, vector<16x300xf32> -> vector<16x300xf32>
    %c0_3 = arith.constant 0 : index
    %c0_4 = arith.constant 0 : index
    %4 = vector.load %arg3[%c0_3, %c0_4] : memref<1x300xf32, #tpu.memory_space<vmem>>, vector<1x300xf32>
    %5 = vector.broadcast %4 : vector<1x300xf32> to vector<16x300xf32>
    %6 = arith.addf %3, %5 : vector<16x300xf32>
    %cst_5 = arith.constant 0.000000e+00 : f32
    %7 = vector.broadcast %cst_5 : f32 to vector<16x300xf32>
    %8 = arith.maximumf %6, %7 : vector<16x300xf32>
    %9 = arith.truncf %8 : vector<16x300xf32> to vector<16x300xbf16>
    %c0_6 = arith.constant 0 : index
    %c0_7 = arith.constant 0 : index
    %10 = vector.load %arg4[%c0_6, %c0_7] : memref<300x300xbf16, #tpu.memory_space<vmem>>, vector<300x300xbf16>
    %cst_8 = arith.constant dense<0.000000e+00> : vector<16x300xf32>
    %11 = tpu.matmul %9, %10, %cst_8 {dimension_numbers = #tpu.dot_dimension_numbers<[1], [0], [0], [1], [0, 0, 1, 1], [], []>} : vector<16x300xbf16>, vector<300x300xbf16>, vector<16x300xf32> -> vector<16x300xf32>
    %c0_9 = arith.constant 0 : index
    %c0_10 = arith.constant 0 : index
    %12 = vector.load %arg5[%c0_9, %c0_10] : memref<1x300xf32, #tpu.memory_space<vmem>>, vector<1x300xf32>
    %13 = vector.broadcast %12 : vector<1x300xf32> to vector<16x300xf32>
    %14 = arith.addf %11, %13 : vector<16x300xf32>
    %c0_11 = arith.constant 0 : index
    %c0_12 = arith.constant 0 : index
    %15 = vector.load %arg6[%c0_11, %c0_12] : memref<16x300xf32, #tpu.memory_space<vmem>>, vector<16x300xf32>
    tpu.vector_store %arg6[%c0_11, %c0_12], %14 {strides = array<i32>} : memref<16x300xf32, #tpu.memory_space<vmem>>, vector<16x300xf32>,
    return
  }
  func.func @transform_0(%arg0: i32) -> (i32, i32) {
    %c0_i32 = arith.constant 0 : i32
    %c0_i32_0 = arith.constant 0 : i32
    return %arg0, %c0_i32 : i32, i32
  }
  func.func @transform_1(%arg0: i32) -> (i32, i32) {
    %c0_i32 = arith.constant 0 : i32
    %c0_i32_0 = arith.constant 0 : i32
    %c0_i32_1 = arith.constant 0 : i32
    return %c0_i32, %c0_i32_0 : i32, i32
  }
  func.func @transform_2(%arg0: i32) -> (i32, i32) {
    %c0_i32 = arith.constant 0 : i32
    %c0_i32_0 = arith.constant 0 : i32
    %c0_i32_1 = arith.constant 0 : i32
    return %c0_i32, %c0_i32_0 : i32, i32
  }
  func.func @transform_3(%arg0: i32) -> (i32, i32) {
    %c0_i32 = arith.constant 0 : i32
    %c0_i32_0 = arith.constant 0 : i32
    %c0_i32_1 = arith.constant 0 : i32
    return %c0_i32, %c0_i32_0 : i32, i32
  }
  func.func @transform_4(%arg0: i32) -> (i32, i32) {
    %c0_i32 = arith.constant 0 : i32
    %c0_i32_0 = arith.constant 0 : i32
    %c0_i32_1 = arith.constant 0 : i32
    return %c0_i32, %c0_i32_0 : i32, i32
  }
  func.func @transform_5(%arg0: i32) -> (i32, i32) {
    %c0_i32 = arith.constant 0 : i32
    %c0_i32_0 = arith.constant 0 : i32
    return %arg0, %c0_i32 : i32, i32
  }
}

</mosaic_0001>

<llo_original>
// kernel: tpu_custom_call.1
$region0: #{tpu_custom_call.1}
  #allocation0 [shape = 'u32[]', space=smem, size = 0x4, offset = 0x4, fixed_abs, tag = 'smem constant byte address 0x4 - core index']
  #allocation1 [shape = 'u32[144,128]{1,0:T(1,128)}', space=vmem, size = 0x12000, scoped, tag = 'internal scratch']
  %s0 = inlined_call_operand.hbm [shape: f32[16,300], index: 0, kind: input, shape index: {}]
  %s1 = inlined_call_operand.hbm [shape: bf16[300,300], index: 1, kind: input, shape index: {}]
  %s2 = inlined_call_operand.vmem [shape: f32[1,300], index: 2, kind: input, shape index: {}]
  %s3 = inlined_call_operand.hbm [shape: bf16[300,300], index: 3, kind: input, shape index: {}]
  %s4 = inlined_call_operand.vmem [shape: f32[1,300], index: 4, kind: input, shape index: {}]
  %s5 = inlined_call_operand.hbm [shape: f32[16,300], index: 5, kind: output, shape index: {}]
  %s6 = sld [smem:[#allocation0]]
  $region42: #{tpu_custom_call.1} parent=0
    _
  %s8 = ssub.s32 1, %s6
  %s9 = scalar_select 0, %s8, %s6
  $region1: #{tpu_custom_call.1} parent=0
    #allocation2 [shape = 'u8[24576]{0}', space=vmem, size = 0x6000, scoped, tag = 'input window, operand 0, single buffered']
    #allocation3 [shape = 's32[1]{0}', space=sflag, size = 0x4, scoped, tag = 'scoped memory for tpu_custom_call.1']
    #allocation4 [shape = 's32[1]{0}', space=sflag, size = 0x4, scoped, tag = 'scoped memory for tpu_custom_call.1']
    #allocation5 [shape = 'u8[233472]{0}', space=vmem, size = 0x39000, scoped, tag = 'input window, operand 1, single buffered']
    #allocation6 [shape = 's32[1]{0}', space=sflag, size = 0x4, scoped, tag = 'scoped memory for tpu_custom_call.1']
    #allocation7 [shape = 'u8[233472]{0}', space=vmem, size = 0x39000, scoped, tag = 'input window, operand 3, single buffered']
    #allocation8 [shape = 'u8[24576]{0}', space=vmem, size = 0x6000, scoped, tag = 'output window, operand 0, single buffered']
    %10 = vsyncpa [#allocation3], 0
    %11 = vsyncpa [#allocation6], 0
    %12 = vsyncpa [#allocation4], 0
    // Predicated region
    $region2: #{tpu_custom_call.1} parent=1 // pred_check
      _
    $region3: #{tpu_custom_call.1} parent=1 // pred_check_branch
      %14 = sbr.rel (0) target = $region5
    $region4: #{tpu_custom_call.1} parent=1 // pred_region
      %s16 = ssub.s32 768, 768
      %17 = vsyncadd [#allocation3], %s16
      %s18 = sshll.u32 [#allocation2], 4
      %s19 = int_to_ptr.vmem [resolvable:$true] %s18
      %24 = dma.hbm_to_vmem [thread:$0]  %s0, 768, %s19, [#allocation3], 384, 384, 24
    $region5: #{tpu_custom_call.1} parent=1 // pred_fallthru
      _
    // Predicated region
    $region6: #{tpu_custom_call.1} parent=1 // pred_check
      _
    $region7: #{tpu_custom_call.1} parent=1 // pred_check_branch
      %26 = sbr.rel (0) target = $region9
    $region8: #{tpu_custom_call.1} parent=1 // pred_region
      %s28 = ssub.s32 7296, 7296
      %29 = vsyncadd [#allocation6], %s28
      %s30 = sshll.u32 [#allocation5], 4
      %s31 = int_to_ptr.vmem [resolvable:$true] %s30
      %36 = dma.hbm_to_vmem [thread:$0]  %s1, 7296, %s31, [#allocation6], 192, 192, 12
    $region9: #{tpu_custom_call.1} parent=1 // pred_fallthru
      _
    // Predicated region
    $region10: #{tpu_custom_call.1} parent=1 // pred_check
      _
    $region11: #{tpu_custom_call.1} parent=1 // pred_check_branch
      %38 = sbr.rel (0) target = $region13
    $region12: #{tpu_custom_call.1} parent=1 // pred_region
      _
    $region13: #{tpu_custom_call.1} parent=1 // pred_fallthru
      _
    // Predicated region
    $region14: #{tpu_custom_call.1} parent=1 // pred_check
      _
    $region15: #{tpu_custom_call.1} parent=1 // pred_check_branch
      %40 = sbr.rel (0) target = $region17
    $region16: #{tpu_custom_call.1} parent=1 // pred_region
      %s42 = ssub.s32 7296, 7296
      %43 = vsyncadd [#allocation6], %s42
      %s44 = sshll.u32 [#allocation7], 4
      %s45 = int_to_ptr.vmem [resolvable:$true] %s44
      %50 = dma.hbm_to_vmem [thread:$0]  %s3, 7296, %s45, [#allocation6], 192, 192, 12
    $region17: #{tpu_custom_call.1} parent=1 // pred_fallthru
      _
    // Predicated region
    $region18: #{tpu_custom_call.1} parent=1 // pred_check
      _
    $region19: #{tpu_custom_call.1} parent=1 // pred_check_branch
      %52 = sbr.rel (0) target = $region21
    $region20: #{tpu_custom_call.1} parent=1 // pred_region
      _
    $region21: #{tpu_custom_call.1} parent=1 // pred_fallthru
      _
    // Predicated region
    $region22: #{tpu_custom_call.1} parent=1 // pred_check
      _
    $region23: #{tpu_custom_call.1} parent=1 // pred_check_branch
      %54 = sbr.rel (0) target = $region25
    $region24: #{tpu_custom_call.1} parent=1 // pred_region
      %55 = dma.done [#allocation3], 768
    $region25: #{tpu_custom_call.1} parent=1 // pred_fallthru
      _
    // Predicated region
    $region26: #{tpu_custom_call.1} parent=1 // pred_check
      _
    $region27: #{tpu_custom_call.1} parent=1 // pred_check_branch
      %57 = sbr.rel (0) target = $region29
    $region28: #{tpu_custom_call.1} parent=1 // pred_region
      %58 = dma.done [#allocation6], 7296
    $region29: #{tpu_custom_call.1} parent=1 // pred_fallthru
      _
    // Predicated region
    $region30: #{tpu_custom_call.1} parent=1 // pred_check
      _
    $region31: #{tpu_custom_call.1} parent=1 // pred_check_branch
      %60 = sbr.rel (0) target = $region33
    $region32: #{tpu_custom_call.1} parent=1 // pred_region
      %61 = dma.done [#allocation6], 7296
    $region33: #{tpu_custom_call.1} parent=1 // pred_fallthru
      _
    %v63 = vld [vmem:[#allocation2] sm:$0xff]
    %v64 = vld [vmem:[#allocation2 + $0x8] sm:$0xff]
    %v65 = vld [vmem:[#allocation2 + $0x10] sm:$0xff]
    %v66 = vld [vmem:[#allocation2 + $0x18] sm:$0xff]
    %v67 = vld [vmem:[#allocation2 + $0x20] sm:$0xff]
    %v68 = vld [vmem:[#allocation2 + $0x28] sm:$0xff]
    %v69 = vpack.c.bf16 %v66, %v63
    %v70 = vpack.c.bf16 %v67, %v64
    %v71 = vpack.c.bf16 %v68, %v65
    %v72 = vld [vmem:[#allocation5] sm:$0xff]
    %v73 = vld [vmem:[#allocation5 + $0x8] sm:$0xf]
    %v74 = vld [vmem:[#allocation5 + $0xc] sm:$0xff]
    %v75 = vld [vmem:[#allocation5 + $0x14] sm:$0xf]
    %v76 = vld [vmem:[#allocation5 + $0x18] sm:$0xff]
    %v77 = vld [vmem:[#allocation5 + $0x20] sm:$0xf]
    %v78 = vld [vmem:[#allocation5 + $0x24] sm:$0xff]
    %v79 = vld [vmem:[#allocation5 + $0x2c] sm:$0xf]
    %v80 = vld [vmem:[#allocation5 + $0x30] sm:$0xff]
    %v81 = vld [vmem:[#allocation5 + $0x38] sm:$0xf]
    %v82 = vld [vmem:[#allocation5 + $0x3c] sm:$0xff]
    %v83 = vld [vmem:[#allocation5 + $0x44] sm:$0xf]
    %v84 = vld [vmem:[#allocation5 + $0x48] sm:$0xff]
    %v85 = vld [vmem:[#allocation5 + $0x50] sm:$0xf]
    %v86 = vld [vmem:[#allocation5 + $0x54] sm:$0xff]
    %v87 = vld [vmem:[#allocation5 + $0x5c] sm:$0xf]
    %v88 = vld [vmem:[#allocation5 + $0x60] sm:$0xff]
    %v89 = vld [vmem:[#allocation5 + $0x68] sm:$0xf]
    %v90 = vld [vmem:[#allocation5 + $0x6c] sm:$0xff]
    %v91 = vld [vmem:[#allocation5 + $0x74] sm:$0xf]
    %v92 = vld [vmem:[#allocation5 + $0x78] sm:$0xff]
    %v93 = vld [vmem:[#allocation5 + $0x80] sm:$0xf]
    %v94 = vld [vmem:[#allocation5 + $0x84] sm:$0xff]
    %v95 = vld [vmem:[#allocation5 + $0x8c] sm:$0xf]
    %v96 = vld [vmem:[#allocation5 + $0x90] sm:$0xff]
    %v97 = vld [vmem:[#allocation5 + $0x98] sm:$0xf]
    %v98 = vld [vmem:[#allocation5 + $0x9c] sm:$0xff]
    %v99 = vld [vmem:[#allocation5 + $0xa4] sm:$0xf]
    %v100 = vld [vmem:[#allocation5 + $0xa8] sm:$0xff]
    %v101 = vld [vmem:[#allocation5 + $0xb0] sm:$0xf]
    %v102 = vld [vmem:[#allocation5 + $0xb4] sm:$0xff]
    %v103 = vld [vmem:[#allocation5 + $0xbc] sm:$0xf]
    %v104 = vld [vmem:[#allocation5 + $0xc0] sm:$0xff]
    %v105 = vld [vmem:[#allocation5 + $0xc8] sm:$0xf]
    %v106 = vld [vmem:[#allocation5 + $0xcc] sm:$0xff]
    %v107 = vld [vmem:[#allocation5 + $0xd4] sm:$0xf]
    %v108 = vld [vmem:[#allocation5 + $0xd8] sm:$0xff]
    %v109 = vld [vmem:[#allocation5 + $0xe0] sm:$0xf]
    %v110 = vld [vmem:[#allocation5 + $0xe4] sm:$0xff]
    %v111 = vld [vmem:[#allocation5 + $0xec] sm:$0xf]
    %v112 = vld [vmem:[#allocation5 + $0xf0] sm:$0xff]
    %v113 = vld [vmem:[#allocation5 + $0xf8] sm:$0xf]
    %v114 = vld [vmem:[#allocation5 + $0xfc] sm:$0xff]
    %v115 = vld [vmem:[#allocation5 + $0x104] sm:$0xf]
    %v116 = vld [vmem:[#allocation5 + $0x108] sm:$0xff]
    %v117 = vld [vmem:[#allocation5 + $0x110] sm:$0xf]
    %v118 = vld [vmem:[#allocation5 + $0x114] sm:$0xff]
    %v119 = vld [vmem:[#allocation5 + $0x11c] sm:$0xf]
    %v120 = vld [vmem:[#allocation5 + $0x120] sm:$0xff]
    %v121 = vld [vmem:[#allocation5 + $0x128] sm:$0xf]
    %v122 = vld [vmem:[#allocation5 + $0x12c] sm:$0xff]
    %v123 = vld [vmem:[#allocation5 + $0x134] sm:$0xf]
    %v124 = vld [vmem:[#allocation5 + $0x138] sm:$0xff]
    %v125 = vld [vmem:[#allocation5 + $0x140] sm:$0xf]
    %v126 = vld [vmem:[#allocation5 + $0x144] sm:$0xff]
    %v127 = vld [vmem:[#allocation5 + $0x14c] sm:$0xf]
    %v128 = vld [vmem:[#allocation5 + $0x150] sm:$0xff]
    %v129 = vld [vmem:[#allocation5 + $0x158] sm:$0xf]
    %v130 = vld [vmem:[#allocation5 + $0x15c] sm:$0xff]
    %v131 = vld [vmem:[#allocation5 + $0x164] sm:$0xf]
    %v132 = vld [vmem:[#allocation5 + $0x168] sm:$0xff]
    %v133 = vld [vmem:[#allocation5 + $0x170] sm:$0xf]
    %v134 = vld [vmem:[#allocation5 + $0x174] sm:$0xff]
    %v135 = vld [vmem:[#allocation5 + $0x17c] sm:$0xf]
    %v136 = vld [vmem:[#allocation5 + $0x180] sm:$0xff]
    %v137 = vld [vmem:[#allocation5 + $0x188] sm:$0xf]
    %v138 = vld [vmem:[#allocation5 + $0x18c] sm:$0xff]
    %v139 = vld [vmem:[#allocation5 + $0x194] sm:$0xf]
    %v140 = vld [vmem:[#allocation5 + $0x198] sm:$0xff]
    %v141 = vld [vmem:[#allocation5 + $0x1a0] sm:$0xf]
    %v142 = vld [vmem:[#allocation5 + $0x1a4] sm:$0xff]
    %v143 = vld [vmem:[#allocation5 + $0x1ac] sm:$0xf]
    %v144 = vld [vmem:[#allocation5 + $0x1b0] sm:$0xff]
    %v145 = vld [vmem:[#allocation5 + $0x1b8] sm:$0xf]
    %v146 = vld [vmem:[#allocation5 + $0x1bc] sm:$0x33]
    %v147 = vld [vmem:[#allocation5 + $0x1c4] sm:$0x3]
    %v148 = vld [vmem:[%s2] sm:$0x7]
    %v150 = vlaneseq
    %v151 = vshrl.u32 %v150, 7
    %v152 = vsub.s32 0, %v151
    %v153 = vrot.slane %v148, %v152
    %v154 = vlaneseq
    %v155 = vshrl.u32 %v154, 7
    %v156 = vsub.s32 1, %v155
    %v157 = vrot.slane %v148, %v156
    %v158 = vlaneseq
    %v159 = vshrl.u32 %v158, 7
    %v160 = vsub.s32 2, %v159
    %v161 = vrot.slane %v148, %v160
    %v241 = vunpack.c.l.b16 %v72
    %v242 = vunpack.c.h.b16 %v72
    %v243 = vunpack.c.l.b16 %v73
    %v244 = vunpack.c.l.b16 %v74
    %v245 = vunpack.c.h.b16 %v74
    %v246 = vunpack.c.l.b16 %v75
    %v247 = vunpack.c.l.b16 %v76
    %v248 = vunpack.c.h.b16 %v76
    %v249 = vunpack.c.l.b16 %v77
    %v250 = vunpack.c.l.b16 %v78
    %v251 = vunpack.c.h.b16 %v78
    %v252 = vunpack.c.l.b16 %v79
    %v253 = vunpack.c.l.b16 %v80
    %v254 = vunpack.c.h.b16 %v80
    %v255 = vunpack.c.l.b16 %v81
    %v256 = vunpack.c.l.b16 %v82
    %v257 = vunpack.c.h.b16 %v82
    %v258 = vunpack.c.l.b16 %v83
    %v259 = vunpack.c.l.b16 %v84
    %v260 = vunpack.c.h.b16 %v84
    %v261 = vunpack.c.l.b16 %v85
    %v262 = vunpack.c.l.b16 %v86
    %v263 = vunpack.c.h.b16 %v86
    %v264 = vunpack.c.l.b16 %v87
    %v265 = vunpack.c.l.b16 %v88
    %v266 = vunpack.c.h.b16 %v88
    %v267 = vunpack.c.l.b16 %v89
    %v268 = vunpack.c.l.b16 %v90
    %v269 = vunpack.c.h.b16 %v90
    %v270 = vunpack.c.l.b16 %v91
    %v271 = vunpack.c.l.b16 %v92
    %v272 = vunpack.c.h.b16 %v92
    %v273 = vunpack.c.l.b16 %v93
    %v274 = vunpack.c.l.b16 %v94
    %v275 = vunpack.c.h.b16 %v94
    %v276 = vunpack.c.l.b16 %v95
    %v277 = vunpack.c.l.b16 %v96
    %v278 = vunpack.c.h.b16 %v96
    %v279 = vunpack.c.l.b16 %v97
    %v280 = vunpack.c.l.b16 %v98
    %v281 = vunpack.c.h.b16 %v98
    %v282 = vunpack.c.l.b16 %v99
    %v283 = vunpack.c.l.b16 %v100
    %v284 = vunpack.c.h.b16 %v100
    %v285 = vunpack.c.l.b16 %v101
    %v286 = vunpack.c.l.b16 %v102
    %v287 = vunpack.c.h.b16 %v102
    %v288 = vunpack.c.l.b16 %v103
    %v289 = vunpack.c.l.b16 %v104
    %v290 = vunpack.c.h.b16 %v104
    %v291 = vunpack.c.l.b16 %v105
    %v292 = vunpack.c.l.b16 %v106
    %v293 = vunpack.c.h.b16 %v106
    %v294 = vunpack.c.l.b16 %v107
    %v295 = vunpack.c.l.b16 %v108
    %v296 = vunpack.c.h.b16 %v108
    %v297 = vunpack.c.l.b16 %v109
    %v298 = vunpack.c.l.b16 %v110
    %v299 = vunpack.c.h.b16 %v110
    %v300 = vunpack.c.l.b16 %v111
    %v301 = vunpack.c.l.b16 %v112
    %v302 = vunpack.c.h.b16 %v112
    %v303 = vunpack.c.l.b16 %v113
    %v304 = vunpack.c.l.b16 %v114
    %v305 = vunpack.c.h.b16 %v114
    %v306 = vunpack.c.l.b16 %v115
    %v307 = vunpack.c.l.b16 %v116
    %v308 = vunpack.c.h.b16 %v116
    %v309 = vunpack.c.l.b16 %v117
    %v310 = vunpack.c.l.b16 %v118
    %v311 = vunpack.c.h.b16 %v118
    %v312 = vunpack.c.l.b16 %v119
    %v313 = vunpack.c.l.b16 %v120
    %v314 = vunpack.c.h.b16 %v120
    %v315 = vunpack.c.l.b16 %v121
    %v316 = vunpack.c.l.b16 %v122
    %v317 = vunpack.c.h.b16 %v122
    %v318 = vunpack.c.l.b16 %v123
    %v319 = vunpack.c.l.b16 %v124
    %v320 = vunpack.c.h.b16 %v124
    %v321 = vunpack.c.l.b16 %v125
    %v322 = vunpack.c.l.b16 %v126
    %v323 = vunpack.c.h.b16 %v126
    %v324 = vunpack.c.l.b16 %v127
    %v325 = vunpack.c.l.b16 %v128
    %v326 = vunpack.c.h.b16 %v128
    %v327 = vunpack.c.l.b16 %v129
    %v328 = vunpack.c.l.b16 %v130
    %v329 = vunpack.c.h.b16 %v130
    %v330 = vunpack.c.l.b16 %v131
    %v331 = vunpack.c.l.b16 %v132
    %v332 = vunpack.c.h.b16 %v132
    %v333 = vunpack.c.l.b16 %v133
    %v334 = vunpack.c.l.b16 %v134
    %v335 = vunpack.c.h.b16 %v134
    %v336 = vunpack.c.l.b16 %v135
    %v337 = vunpack.c.l.b16 %v136
    %v338 = vunpack.c.h.b16 %v136
    %v339 = vunpack.c.l.b16 %v137
    %v340 = vunpack.c.l.b16 %v138
    %v341 = vunpack.c.h.b16 %v138
    %v342 = vunpack.c.l.b16 %v139
    %v343 = vunpack.c.l.b16 %v140
    %v344 = vunpack.c.h.b16 %v140
    %v345 = vunpack.c.l.b16 %v141
    %v346 = vunpack.c.l.b16 %v142
    %v347 = vunpack.c.h.b16 %v142
    %v348 = vunpack.c.l.b16 %v143
    %v349 = vunpack.c.l.b16 %v144
    %v350 = vunpack.c.h.b16 %v144
    %v351 = vunpack.c.l.b16 %v145
    %v352 = vunpack.c.l.b16 %v146
    %v353 = vunpack.c.h.b16 %v146
    %v354 = vunpack.c.l.b16 %v147
    %v355 = vpack.c.b16 %v244, %v241
    %v356 = vpack.c.b16 %v245, %v242
    %v357 = vpack.c.b16 %v246, %v243
    %v358 = vpack.c.b16 %v250, %v247
    %v359 = vpack.c.b16 %v251, %v248
    %v360 = vpack.c.b16 %v252, %v249
    %v361 = vpack.c.b16 %v256, %v253
    %v362 = vpack.c.b16 %v257, %v254
    %v363 = vpack.c.b16 %v258, %v255
    %v364 = vpack.c.b16 %v262, %v259
    %v365 = vpack.c.b16 %v263, %v260
    %v366 = vpack.c.b16 %v264, %v261
    %v367 = vpack.c.b16 %v268, %v265
    %v368 = vpack.c.b16 %v269, %v266
    %v369 = vpack.c.b16 %v270, %v267
    %v370 = vpack.c.b16 %v274, %v271
    %v371 = vpack.c.b16 %v275, %v272
    %v372 = vpack.c.b16 %v276, %v273
    %v373 = vpack.c.b16 %v280, %v277
    %v374 = vpack.c.b16 %v281, %v278
    %v375 = vpack.c.b16 %v282, %v279
    %v376 = vpack.c.b16 %v286, %v283
    %v377 = vpack.c.b16 %v287, %v284
    %v378 = vpack.c.b16 %v288, %v285
    %v379 = vpack.c.b16 %v292, %v289
    %v380 = vpack.c.b16 %v293, %v290
    %v381 = vpack.c.b16 %v294, %v291
    %v382 = vpack.c.b16 %v298, %v295
    %v383 = vpack.c.b16 %v299, %v296
    %v384 = vpack.c.b16 %v300, %v297
    %v385 = vpack.c.b16 %v304, %v301
    %v386 = vpack.c.b16 %v305, %v302
    %v387 = vpack.c.b16 %v306, %v303
    %v388 = vpack.c.b16 %v310, %v307
    %v389 = vpack.c.b16 %v311, %v308
    %v390 = vpack.c.b16 %v312, %v309
    %v391 = vpack.c.b16 %v316, %v313
    %v392 = vpack.c.b16 %v317, %v314
    %v393 = vpack.c.b16 %v318, %v315
    %v394 = vpack.c.b16 %v322, %v319
    %v395 = vpack.c.b16 %v323, %v320
    %v396 = vpack.c.b16 %v324, %v321
    %v397 = vpack.c.b16 %v328, %v325
    %v398 = vpack.c.b16 %v329, %v326
    %v399 = vpack.c.b16 %v330, %v327
    %v400 = vpack.c.b16 %v334, %v331
    %v401 = vpack.c.b16 %v335, %v332
    %v402 = vpack.c.b16 %v336, %v333
    %v403 = vpack.c.b16 %v340, %v337
    %v404 = vpack.c.b16 %v341, %v338
    %v405 = vpack.c.b16 %v342, %v339
    %v406 = vpack.c.b16 %v346, %v343
    %v407 = vpack.c.b16 %v347, %v344
    %v408 = vpack.c.b16 %v348, %v345
    %v409 = vpack.c.b16 %v352, %v349
    %v410 = vpack.c.b16 %v353, %v350
    %v411 = vpack.c.b16 %v354, %v351
    %vm466 = vcmask 359424
    %v468 = vsel %vm466, %v71, 0
    %vm470 = vcmask 1045504
    %v472 = vsel %vm470, %v409, 0
    %v475 = vsel %vm470, %v410, 0
    %v478 = vsel %vm470, %v411, 0
    %480 = vmatprep.subr.bf16.mxu0 %v356
    %481 = vmatpush1.bf16.msra.mxu0 %v355
    %482 = vmatprep.subr.bf16.mxu0 %v359
    %483 = vmatpush1.bf16.msra.mxu0 %v358
    %484 = vmatprep.subr.bf16.mxu0 %v362
    %485 = vmatpush1.bf16.msra.mxu0 %v361
    %486 = vmatprep.subr.bf16.mxu0 %v365
    %487 = vmatpush1.bf16.msra.mxu0 %v364
    %488 = vmatprep.subr.bf16.mxu0 %v368
    %489 = vmatpush1.bf16.msra.mxu0 %v367
    %490 = vmatprep.subr.bf16.mxu0 %v371
    %491 = vmatpush1.bf16.msra.mxu0 %v370
    %492 = vmatprep.subr.bf16.mxu0 %v374
    %493 = vmatpush1.bf16.msra.mxu0 %v373
    %494 = vmatprep.subr.bf16.mxu0 %v377
    %495 = vmatpush1.bf16.msra.mxu0 %v376
    %496 = vmatprep.subr.bf16.mxu0 %v380
    %497 = vmatpush1.bf16.msra.mxu0 %v379
    %498 = vmatprep.subr.bf16.mxu0 %v383
    %499 = vmatpush1.bf16.msra.mxu0 %v382
    %500 = vmatprep.subr.bf16.mxu0 %v386
    %501 = vmatpush1.bf16.msra.mxu0 %v385
    %502 = vmatprep.subr.bf16.mxu0 %v389
    %503 = vmatpush1.bf16.msra.mxu0 %v388
    %504 = vmatprep.subr.bf16.mxu0 %v392
    %505 = vmatpush1.bf16.msra.mxu0 %v391
    %506 = vmatprep.subr.bf16.mxu0 %v395
    %507 = vmatpush1.bf16.msra.mxu0 %v394
    %508 = vmatprep.subr.bf16.mxu0 %v398
    %509 = vmatpush1.bf16.msra.mxu0 %v397
    %510 = vmatprep.subr.bf16.mxu0 %v401
    %511 = vmatpush1.bf16.msra.mxu0 %v400
    %512 = vmatprep.mubr.bf16.mxu0 %v70
    %513 = vmatmul.mubr.bf16.gmra.mrb[0].mxu0 %v69
    %v514 = vpop.f32.mrb[0].mxu0
    %v515 = vadd.f32 %v153, %v514
    %v516 = vpop.f32.mrb[0].mxu0
    %v517 = vadd.f32 %v157, %v516
    %v518 = vpop.f32.mrb[0].mxu0
    %v519 = vadd.f32 %v153, %v518
    %v520 = vpop.f32.mrb[0].mxu0
    %v521 = vadd.f32 %v157, %v520
    %522 = vdwg.mxu0
    %523 = vmatprep.subr.bf16.mxu0 %v404
    %524 = vmatpush1.bf16.msra.mxu0 %v403
    %525 = vmatprep.subr.bf16.mxu0 %v407
    %526 = vmatpush1.bf16.msra.mxu0 %v406
    %527 = vmatprep.subr.bf16.mxu0 %v475
    %528 = vmatpush1.bf16.msra.mxu0 %v472
    %529 = vmatprep.subr.bf16.mxu0 0
    %530 = vmatpush1.bf16.msra.mxu0 0
    %531 = vmatprep.subr.bf16.mxu0 0
    %532 = vmatpush1.bf16.msra.mxu0 0
    %533 = vmatprep.subr.bf16.mxu0 0
    %534 = vmatpush1.bf16.msra.mxu0 0
    %535 = vmatprep.subr.bf16.mxu0 0
    %536 = vmatpush1.bf16.msra.mxu0 0
    %537 = vmatprep.subr.bf16.mxu0 0
    %538 = vmatpush1.bf16.msra.mxu0 0
    %539 = vmatprep.subr.bf16.mxu0 0
    %540 = vmatpush1.bf16.msra.mxu0 0
    %541 = vmatprep.subr.bf16.mxu0 0
    %542 = vmatpush1.bf16.msra.mxu0 0
    %543 = vmatprep.subr.bf16.mxu0 0
    %544 = vmatpush1.bf16.msra.mxu0 0
    %545 = vmatprep.subr.bf16.mxu0 0
    %546 = vmatpush1.bf16.msra.mxu0 0
    %547 = vmatprep.subr.bf16.mxu0 0
    %548 = vmatpush1.bf16.msra.mxu0 0
    %549 = vmatprep.subr.bf16.mxu0 0
    %550 = vmatpush1.bf16.msra.mxu0 0
    %551 = vmatprep.subr.bf16.mxu0 0
    %552 = vmatpush1.bf16.msra.mxu0 0
    %553 = vmatprep.subr.bf16.mxu0 0
    %554 = vmatpush1.bf16.msra.mxu0 0
    %555 = vmatprep.mubr.bf16.mxu0 0
    %556 = vmatmul.mubr.bf16.gmra.mrb[0].mxu0 %v468
    %v557 = vpop.f32.mrb[0].mxu0
    %v558 = vadd.f32 %v515, %v557
    %v559 = vpop.f32.mrb[0].mxu0
    %v560 = vadd.f32 %v517, %v559
    %v561 = vpop.f32.mrb[0].mxu0
    %v562 = vadd.f32 %v519, %v561
    %v563 = vpop.f32.mrb[0].mxu0
    %v564 = vadd.f32 %v521, %v563
    %565 = vdwg.mxu0
    %566 = vmatprep.subr.bf16.mxu0 0
    %567 = vmatpush1.bf16.msra.mxu0 %v357
    %568 = vmatprep.subr.bf16.mxu0 0
    %569 = vmatpush1.bf16.msra.mxu0 %v360
    %570 = vmatprep.subr.bf16.mxu0 0
    %571 = vmatpush1.bf16.msra.mxu0 %v363
    %572 = vmatprep.subr.bf16.mxu0 0
    %573 = vmatpush1.bf16.msra.mxu0 %v366
    %574 = vmatprep.subr.bf16.mxu0 0
    %575 = vmatpush1.bf16.msra.mxu0 %v369
    %576 = vmatprep.subr.bf16.mxu0 0
    %577 = vmatpush1.bf16.msra.mxu0 %v372
    %578 = vmatprep.subr.bf16.mxu0 0
    %579 = vmatpush1.bf16.msra.mxu0 %v375
    %580 = vmatprep.subr.bf16.mxu0 0
    %581 = vmatpush1.bf16.msra.mxu0 %v378
    %582 = vmatprep.subr.bf16.mxu0 0
    %583 = vmatpush1.bf16.msra.mxu0 %v381
    %584 = vmatprep.subr.bf16.mxu0 0
    %585 = vmatpush1.bf16.msra.mxu0 %v384
    %586 = vmatprep.subr.bf16.mxu0 0
    %587 = vmatpush1.bf16.msra.mxu0 %v387
    %588 = vmatprep.subr.bf16.mxu0 0
    %589 = vmatpush1.bf16.msra.mxu0 %v390
    %590 = vmatprep.subr.bf16.mxu0 0
    %591 = vmatpush1.bf16.msra.mxu0 %v393
    %592 = vmatprep.subr.bf16.mxu0 0
    %593 = vmatpush1.bf16.msra.mxu0 %v396
    %594 = vmatprep.subr.bf16.mxu0 0
    %595 = vmatpush1.bf16.msra.mxu0 %v399
    %596 = vmatprep.subr.bf16.mxu0 0
    %597 = vmatpush1.bf16.msra.mxu0 %v402
    %598 = vmatprep.mubr.bf16.mxu0 %v70
    %599 = vmatmul.mubr.bf16.gmra.mrb[0].mxu0 %v69
    %v600 = vpop.f32.mrb[0].mxu0
    %v601 = vadd.f32 %v161, %v600
    %v602 = vpop.f32.mrb[0].mxu0
    %v603 = vpop.f32.mrb[0].mxu0
    %v604 = vadd.f32 %v161, %v603
    %v605 = vpop.f32.mrb[0].mxu0
    %606 = vdwg.mxu0
    %607 = vmatprep.subr.bf16.mxu0 0
    %608 = vmatpush1.bf16.msra.mxu0 %v405
    %609 = vmatprep.subr.bf16.mxu0 0
    %610 = vmatpush1.bf16.msra.mxu0 %v408
    %611 = vmatprep.subr.bf16.mxu0 0
    %612 = vmatpush1.bf16.msra.mxu0 %v478
    %613 = vmatprep.subr.bf16.mxu0 0
    %614 = vmatpush1.bf16.msra.mxu0 0
    %615 = vmatprep.subr.bf16.mxu0 0
    %616 = vmatpush1.bf16.msra.mxu0 0
    %617 = vmatprep.subr.bf16.mxu0 0
    %618 = vmatpush1.bf16.msra.mxu0 0
    %619 = vmatprep.subr.bf16.mxu0 0
    %620 = vmatpush1.bf16.msra.mxu0 0
    %621 = vmatprep.subr.bf16.mxu0 0
    %622 = vmatpush1.bf16.msra.mxu0 0
    %623 = vmatprep.subr.bf16.mxu0 0
    %624 = vmatpush1.bf16.msra.mxu0 0
    %625 = vmatprep.subr.bf16.mxu0 0
    %626 = vmatpush1.bf16.msra.mxu0 0
    %627 = vmatprep.subr.bf16.mxu0 0
    %628 = vmatpush1.bf16.msra.mxu0 0
    %629 = vmatprep.subr.bf16.mxu0 0
    %630 = vmatpush1.bf16.msra.mxu0 0
    %631 = vmatprep.subr.bf16.mxu0 0
    %632 = vmatpush1.bf16.msra.mxu0 0
    %633 = vmatprep.subr.bf16.mxu0 0
    %634 = vmatpush1.bf16.msra.mxu0 0
    %635 = vmatprep.subr.bf16.mxu0 0
    %636 = vmatpush1.bf16.msra.mxu0 0
    %637 = vmatprep.subr.bf16.mxu0 0
    %638 = vmatpush1.bf16.msra.mxu0 0
    %639 = vmatprep.mubr.bf16.mxu0 0
    %640 = vmatmul.mubr.bf16.gmra.mrb[0].mxu0 %v468
    %v641 = vpop.f32.mrb[0].mxu0
    %v642 = vadd.f32 %v601, %v641
    %v643 = vpop.f32.mrb[0].mxu0
    %v644 = vpop.f32.mrb[0].mxu0
    %v645 = vadd.f32 %v604, %v644
    %v646 = vpop.f32.mrb[0].mxu0
    %647 = vdwg.mxu0
    %v648 = vmax.f32 %v558, 0.0
    %v649 = vmax.f32 %v560, 0.0
    %v650 = vmax.f32 %v642, 0.0
    %v651 = vmax.f32 %v562, 0.0
    %v652 = vmax.f32 %v564, 0.0
    %v653 = vmax.f32 %v645, 0.0
    %v654 = vpack.c.bf16 %v651, %v648
    %v655 = vpack.c.bf16 %v652, %v649
    %v656 = vpack.c.bf16 %v653, %v650
    %v657 = vld [vmem:[#allocation7] sm:$0xff]
    %v658 = vld [vmem:[#allocation7 + $0x8] sm:$0xf]
    %v659 = vld [vmem:[#allocation7 + $0xc] sm:$0xff]
    %v660 = vld [vmem:[#allocation7 + $0x14] sm:$0xf]
    %v661 = vld [vmem:[#allocation7 + $0x18] sm:$0xff]
    %v662 = vld [vmem:[#allocation7 + $0x20] sm:$0xf]
    %v663 = vld [vmem:[#allocation7 + $0x24] sm:$0xff]
    %v664 = vld [vmem:[#allocation7 + $0x2c] sm:$0xf]
    %v665 = vld [vmem:[#allocation7 + $0x30] sm:$0xff]
    %v666 = vld [vmem:[#allocation7 + $0x38] sm:$0xf]
    %v667 = vld [vmem:[#allocation7 + $0x3c] sm:$0xff]
    %v668 = vld [vmem:[#allocation7 + $0x44] sm:$0xf]
    %v669 = vld [vmem:[#allocation7 + $0x48] sm:$0xff]
    %v670 = vld [vmem:[#allocation7 + $0x50] sm:$0xf]
    %v671 = vld [vmem:[#allocation7 + $0x54] sm:$0xff]
    %v672 = vld [vmem:[#allocation7 + $0x5c] sm:$0xf]
    %v673 = vld [vmem:[#allocation7 + $0x60] sm:$0xff]
    %v674 = vld [vmem:[#allocation7 + $0x68] sm:$0xf]
    %v675 = vld [vmem:[#allocation7 + $0x6c] sm:$0xff]
    %v676 = vld [vmem:[#allocation7 + $0x74] sm:$0xf]
    %v677 = vld [vmem:[#allocation7 + $0x78] sm:$0xff]
    %v678 = vld [vmem:[#allocation7 + $0x80] sm:$0xf]
    %v679 = vld [vmem:[#allocation7 + $0x84] sm:$0xff]
    %v680 = vld [vmem:[#allocation7 + $0x8c] sm:$0xf]
    %v681 = vld [vmem:[#allocation7 + $0x90] sm:$0xff]
    %v682 = vld [vmem:[#allocation7 + $0x98] sm:$0xf]
    %v683 = vld [vmem:[#allocation7 + $0x9c] sm:$0xff]
    %v684 = vld [vmem:[#allocation7 + $0xa4] sm:$0xf]
    %v685 = vld [vmem:[#allocation7 + $0xa8] sm:$0xff]
    %v686 = vld [vmem:[#allocation7 + $0xb0] sm:$0xf]
    %v687 = vld [vmem:[#allocation7 + $0xb4] sm:$0xff]
    %v688 = vld [vmem:[#allocation7 + $0xbc] sm:$0xf]
    %v689 = vld [vmem:[#allocation7 + $0xc0] sm:$0xff]
    %v690 = vld [vmem:[#allocation7 + $0xc8] sm:$0xf]
    %v691 = vld [vmem:[#allocation7 + $0xcc] sm:$0xff]
    %v692 = vld [vmem:[#allocation7 + $0xd4] sm:$0xf]
    %v693 = vld [vmem:[#allocation7 + $0xd8] sm:$0xff]
    %v694 = vld [vmem:[#allocation7 + $0xe0] sm:$0xf]
    %v695 = vld [vmem:[#allocation7 + $0xe4] sm:$0xff]
    %v696 = vld [vmem:[#allocation7 + $0xec] sm:$0xf]
    %v697 = vld [vmem:[#allocation7 + $0xf0] sm:$0xff]
    %v698 = vld [vmem:[#allocation7 + $0xf8] sm:$0xf]
    %v699 = vld [vmem:[#allocation7 + $0xfc] sm:$0xff]
    %v700 = vld [vmem:[#allocation7 + $0x104] sm:$0xf]
    %v701 = vld [vmem:[#allocation7 + $0x108] sm:$0xff]
    %v702 = vld [vmem:[#allocation7 + $0x110] sm:$0xf]
    %v703 = vld [vmem:[#allocation7 + $0x114] sm:$0xff]
    %v704 = vld [vmem:[#allocation7 + $0x11c] sm:$0xf]
    %v705 = vld [vmem:[#allocation7 + $0x120] sm:$0xff]
    %v706 = vld [vmem:[#allocation7 + $0x128] sm:$0xf]
    %v707 = vld [vmem:[#allocation7 + $0x12c] sm:$0xff]
    %v708 = vld [vmem:[#allocation7 + $0x134] sm:$0xf]
    %v709 = vld [vmem:[#allocation7 + $0x138] sm:$0xff]
    %v710 = vld [vmem:[#allocation7 + $0x140] sm:$0xf]
    %v711 = vld [vmem:[#allocation7 + $0x144] sm:$0xff]
    %v712 = vld [vmem:[#allocation7 + $0x14c] sm:$0xf]
    %v713 = vld [vmem:[#allocation7 + $0x150] sm:$0xff]
    %v714 = vld [vmem:[#allocation7 + $0x158] sm:$0xf]
    %v715 = vld [vmem:[#allocation7 + $0x15c] sm:$0xff]
    %v716 = vld [vmem:[#allocation7 + $0x164] sm:$0xf]
    %v717 = vld [vmem:[#allocation7 + $0x168] sm:$0xff]
    %v718 = vld [vmem:[#allocation7 + $0x170] sm:$0xf]
    %v719 = vld [vmem:[#allocation7 + $0x174] sm:$0xff]
    %v720 = vld [vmem:[#allocation7 + $0x17c] sm:$0xf]
    %v721 = vld [vmem:[#allocation7 + $0x180] sm:$0xff]
    %v722 = vld [vmem:[#allocation7 + $0x188] sm:$0xf]
    %v723 = vld [vmem:[#allocation7 + $0x18c] sm:$0xff]
    %v724 = vld [vmem:[#allocation7 + $0x194] sm:$0xf]
    %v725 = vld [vmem:[#allocation7 + $0x198] sm:$0xff]
    %v726 = vld [vmem:[#allocation7 + $0x1a0] sm:$0xf]
    %v727 = vld [vmem:[#allocation7 + $0x1a4] sm:$0xff]
    %v728 = vld [vmem:[#allocation7 + $0x1ac] sm:$0xf]
    %v729 = vld [vmem:[#allocation7 + $0x1b0] sm:$0xff]
    %v730 = vld [vmem:[#allocation7 + $0x1b8] sm:$0xf]
    %v731 = vld [vmem:[#allocation7 + $0x1bc] sm:$0x33]
    %v732 = vld [vmem:[#allocation7 + $0x1c4] sm:$0x3]
    %v733 = vld [vmem:[%s4] sm:$0x7]
    %v735 = vlaneseq
    %v736 = vshrl.u32 %v735, 7
    %v737 = vsub.s32 0, %v736
    %v738 = vrot.slane %v733, %v737
    %v739 = vlaneseq
    %v740 = vshrl.u32 %v739, 7
    %v741 = vsub.s32 1, %v740
    %v742 = vrot.slane %v733, %v741
    %v743 = vlaneseq
    %v744 = vshrl.u32 %v743, 7
    %v745 = vsub.s32 2, %v744
    %v746 = vrot.slane %v733, %v745
    %v826 = vunpack.c.l.b16 %v657
    %v827 = vunpack.c.h.b16 %v657
    %v828 = vunpack.c.l.b16 %v658
    %v829 = vunpack.c.l.b16 %v659
    %v830 = vunpack.c.h.b16 %v659
    %v831 = vunpack.c.l.b16 %v660
    %v832 = vunpack.c.l.b16 %v661
    %v833 = vunpack.c.h.b16 %v661
    %v834 = vunpack.c.l.b16 %v662
    %v835 = vunpack.c.l.b16 %v663
    %v836 = vunpack.c.h.b16 %v663
    %v837 = vunpack.c.l.b16 %v664
    %v838 = vunpack.c.l.b16 %v665
    %v839 = vunpack.c.h.b16 %v665
    %v840 = vunpack.c.l.b16 %v666
    %v841 = vunpack.c.l.b16 %v667
    %v842 = vunpack.c.h.b16 %v667
    %v843 = vunpack.c.l.b16 %v668
    %v844 = vunpack.c.l.b16 %v669
    %v845 = vunpack.c.h.b16 %v669
    %v846 = vunpack.c.l.b16 %v670
    %v847 = vunpack.c.l.b16 %v671
    %v848 = vunpack.c.h.b16 %v671
    %v849 = vunpack.c.l.b16 %v672
    %v850 = vunpack.c.l.b16 %v673
    %v851 = vunpack.c.h.b16 %v673
    %v852 = vunpack.c.l.b16 %v674
    %v853 = vunpack.c.l.b16 %v675
    %v854 = vunpack.c.h.b16 %v675
    %v855 = vunpack.c.l.b16 %v676
    %v856 = vunpack.c.l.b16 %v677
    %v857 = vunpack.c.h.b16 %v677
    %v858 = vunpack.c.l.b16 %v678
    %v859 = vunpack.c.l.b16 %v679
    %v860 = vunpack.c.h.b16 %v679
    %v861 = vunpack.c.l.b16 %v680
    %v862 = vunpack.c.l.b16 %v681
    %v863 = vunpack.c.h.b16 %v681
    %v864 = vunpack.c.l.b16 %v682
    %v865 = vunpack.c.l.b16 %v683
    %v866 = vunpack.c.h.b16 %v683
    %v867 = vunpack.c.l.b16 %v684
    %v868 = vunpack.c.l.b16 %v685
    %v869 = vunpack.c.h.b16 %v685
    %v870 = vunpack.c.l.b16 %v686
    %v871 = vunpack.c.l.b16 %v687
    %v872 = vunpack.c.h.b16 %v687
    %v873 = vunpack.c.l.b16 %v688
    %v874 = vunpack.c.l.b16 %v689
    %v875 = vunpack.c.h.b16 %v689
    %v876 = vunpack.c.l.b16 %v690
    %v877 = vunpack.c.l.b16 %v691
    %v878 = vunpack.c.h.b16 %v691
    %v879 = vunpack.c.l.b16 %v692
    %v880 = vunpack.c.l.b16 %v693
    %v881 = vunpack.c.h.b16 %v693
    %v882 = vunpack.c.l.b16 %v694
    %v883 = vunpack.c.l.b16 %v695
    %v884 = vunpack.c.h.b16 %v695
    %v885 = vunpack.c.l.b16 %v696
    %v886 = vunpack.c.l.b16 %v697
    %v887 = vunpack.c.h.b16 %v697
    %v888 = vunpack.c.l.b16 %v698
    %v889 = vunpack.c.l.b16 %v699
    %v890 = vunpack.c.h.b16 %v699
    %v891 = vunpack.c.l.b16 %v700
    %v892 = vunpack.c.l.b16 %v701
    %v893 = vunpack.c.h.b16 %v701
    %v894 = vunpack.c.l.b16 %v702
    %v895 = vunpack.c.l.b16 %v703
    %v896 = vunpack.c.h.b16 %v703
    %v897 = vunpack.c.l.b16 %v704
    %v898 = vunpack.c.l.b16 %v705
    %v899 = vunpack.c.h.b16 %v705
    %v900 = vunpack.c.l.b16 %v706
    %v901 = vunpack.c.l.b16 %v707
    %v902 = vunpack.c.h.b16 %v707
    %v903 = vunpack.c.l.b16 %v708
    %v904 = vunpack.c.l.b16 %v709
    %v905 = vunpack.c.h.b16 %v709
    %v906 = vunpack.c.l.b16 %v710
    %v907 = vunpack.c.l.b16 %v711
    %v908 = vunpack.c.h.b16 %v711
    %v909 = vunpack.c.l.b16 %v712
    %v910 = vunpack.c.l.b16 %v713
    %v911 = vunpack.c.h.b16 %v713
    %v912 = vunpack.c.l.b16 %v714
    %v913 = vunpack.c.l.b16 %v715
    %v914 = vunpack.c.h.b16 %v715
    %v915 = vunpack.c.l.b16 %v716
    %v916 = vunpack.c.l.b16 %v717
    %v917 = vunpack.c.h.b16 %v717
    %v918 = vunpack.c.l.b16 %v718
    %v919 = vunpack.c.l.b16 %v719
    %v920 = vunpack.c.h.b16 %v719
    %v921 = vunpack.c.l.b16 %v720
    %v922 = vunpack.c.l.b16 %v721
    %v923 = vunpack.c.h.b16 %v721
    %v924 = vunpack.c.l.b16 %v722
    %v925 = vunpack.c.l.b16 %v723
    %v926 = vunpack.c.h.b16 %v723
    %v927 = vunpack.c.l.b16 %v724
    %v928 = vunpack.c.l.b16 %v725
    %v929 = vunpack.c.h.b16 %v725
    %v930 = vunpack.c.l.b16 %v726
    %v931 = vunpack.c.l.b16 %v727
    %v932 = vunpack.c.h.b16 %v727
    %v933 = vunpack.c.l.b16 %v728
    %v934 = vunpack.c.l.b16 %v729
    %v935 = vunpack.c.h.b16 %v729
    %v936 = vunpack.c.l.b16 %v730
    %v937 = vunpack.c.l.b16 %v731
    %v938 = vunpack.c.h.b16 %v731
    %v939 = vunpack.c.l.b16 %v732
    %v940 = vpack.c.b16 %v829, %v826
    %v941 = vpack.c.b16 %v830, %v827
    %v942 = vpack.c.b16 %v831, %v828
    %v943 = vpack.c.b16 %v835, %v832
    %v944 = vpack.c.b16 %v836, %v833
    %v945 = vpack.c.b16 %v837, %v834
    %v946 = vpack.c.b16 %v841, %v838
    %v947 = vpack.c.b16 %v842, %v839
    %v948 = vpack.c.b16 %v843, %v840
    %v949 = vpack.c.b16 %v847, %v844
    %v950 = vpack.c.b16 %v848, %v845
    %v951 = vpack.c.b16 %v849, %v846
    %v952 = vpack.c.b16 %v853, %v850
    %v953 = vpack.c.b16 %v854, %v851
    %v954 = vpack.c.b16 %v855, %v852
    %v955 = vpack.c.b16 %v859, %v856
    %v956 = vpack.c.b16 %v860, %v857
    %v957 = vpack.c.b16 %v861, %v858
    %v958 = vpack.c.b16 %v865, %v862
    %v959 = vpack.c.b16 %v866, %v863
    %v960 = vpack.c.b16 %v867, %v864
    %v961 = vpack.c.b16 %v871, %v868
    %v962 = vpack.c.b16 %v872, %v869
    %v963 = vpack.c.b16 %v873, %v870
    %v964 = vpack.c.b16 %v877, %v874
    %v965 = vpack.c.b16 %v878, %v875
    %v966 = vpack.c.b16 %v879, %v876
    %v967 = vpack.c.b16 %v883, %v880
    %v968 = vpack.c.b16 %v884, %v881
    %v969 = vpack.c.b16 %v885, %v882
    %v970 = vpack.c.b16 %v889, %v886
    %v971 = vpack.c.b16 %v890, %v887
    %v972 = vpack.c.b16 %v891, %v888
    %v973 = vpack.c.b16 %v895, %v892
    %v974 = vpack.c.b16 %v896, %v893
    %v975 = vpack.c.b16 %v897, %v894
    %v976 = vpack.c.b16 %v901, %v898
    %v977 = vpack.c.b16 %v902, %v899
    %v978 = vpack.c.b16 %v903, %v900
    %v979 = vpack.c.b16 %v907, %v904
    %v980 = vpack.c.b16 %v908, %v905
    %v981 = vpack.c.b16 %v909, %v906
    %v982 = vpack.c.b16 %v913, %v910
    %v983 = vpack.c.b16 %v914, %v911
    %v984 = vpack.c.b16 %v915, %v912
    %v985 = vpack.c.b16 %v919, %v916
    %v986 = vpack.c.b16 %v920, %v917
    %v987 = vpack.c.b16 %v921, %v918
    %v988 = vpack.c.b16 %v925, %v922
    %v989 = vpack.c.b16 %v926, %v923
    %v990 = vpack.c.b16 %v927, %v924
    %v991 = vpack.c.b16 %v931, %v928
    %v992 = vpack.c.b16 %v932, %v929
    %v993 = vpack.c.b16 %v933, %v930
    %v994 = vpack.c.b16 %v937, %v934
    %v995 = vpack.c.b16 %v938, %v935
    %v996 = vpack.c.b16 %v939, %v936
    %v1052 = vsel %vm466, %v656, 0
    %v1055 = vsel %vm470, %v994, 0
    %v1058 = vsel %vm470, %v995, 0
    %v1061 = vsel %vm470, %v996, 0
    %1063 = vmatprep.subr.bf16.mxu0 %v941
    %1064 = vmatpush1.bf16.msra.mxu0 %v940
    %1065 = vmatprep.subr.bf16.mxu0 %v944
    %1066 = vmatpush1.bf16.msra.mxu0 %v943
    %1067 = vmatprep.subr.bf16.mxu0 %v947
    %1068 = vmatpush1.bf16.msra.mxu0 %v946
    %1069 = vmatprep.subr.bf16.mxu0 %v950
    %1070 = vmatpush1.bf16.msra.mxu0 %v949
    %1071 = vmatprep.subr.bf16.mxu0 %v953
    %1072 = vmatpush1.bf16.msra.mxu0 %v952
    %1073 = vmatprep.subr.bf16.mxu0 %v956
    %1074 = vmatpush1.bf16.msra.mxu0 %v955
    %1075 = vmatprep.subr.bf16.mxu0 %v959
    %1076 = vmatpush1.bf16.msra.mxu0 %v958
    %1077 = vmatprep.subr.bf16.mxu0 %v962
    %1078 = vmatpush1.bf16.msra.mxu0 %v961
    %1079 = vmatprep.subr.bf16.mxu0 %v965
    %1080 = vmatpush1.bf16.msra.mxu0 %v964
    %1081 = vmatprep.subr.bf16.mxu0 %v968
    %1082 = vmatpush1.bf16.msra.mxu0 %v967
    %1083 = vmatprep.subr.bf16.mxu0 %v971
    %1084 = vmatpush1.bf16.msra.mxu0 %v970
    %1085 = vmatprep.subr.bf16.mxu0 %v974
    %1086 = vmatpush1.bf16.msra.mxu0 %v973
    %1087 = vmatprep.subr.bf16.mxu0 %v977
    %1088 = vmatpush1.bf16.msra.mxu0 %v976
    %1089 = vmatprep.subr.bf16.mxu0 %v980
    %1090 = vmatpush1.bf16.msra.mxu0 %v979
    %1091 = vmatprep.subr.bf16.mxu0 %v983
    %1092 = vmatpush1.bf16.msra.mxu0 %v982
    %1093 = vmatprep.subr.bf16.mxu0 %v986
    %1094 = vmatpush1.bf16.msra.mxu0 %v985
    %1095 = vmatprep.mubr.bf16.mxu0 %v655
    %1096 = vmatmul.mubr.bf16.gmra.mrb[0].mxu0 %v654
    %v1097 = vpop.f32.mrb[0].mxu0
    %v1098 = vadd.f32 %v738, %v1097
    %v1099 = vpop.f32.mrb[0].mxu0
    %v1100 = vadd.f32 %v742, %v1099
    %v1101 = vpop.f32.mrb[0].mxu0
    %v1102 = vadd.f32 %v738, %v1101
    %v1103 = vpop.f32.mrb[0].mxu0
    %v1104 = vadd.f32 %v742, %v1103
    %1105 = vdwg.mxu0
    %1106 = vmatprep.subr.bf16.mxu0 %v989
    %1107 = vmatpush1.bf16.msra.mxu0 %v988
    %1108 = vmatprep.subr.bf16.mxu0 %v992
    %1109 = vmatpush1.bf16.msra.mxu0 %v991
    %1110 = vmatprep.subr.bf16.mxu0 %v1058
    %1111 = vmatpush1.bf16.msra.mxu0 %v1055
    %1112 = vmatprep.subr.bf16.mxu0 0
    %1113 = vmatpush1.bf16.msra.mxu0 0
    %1114 = vmatprep.subr.bf16.mxu0 0
    %1115 = vmatpush1.bf16.msra.mxu0 0
    %1116 = vmatprep.subr.bf16.mxu0 0
    %1117 = vmatpush1.bf16.msra.mxu0 0
    %1118 = vmatprep.subr.bf16.mxu0 0
    %1119 = vmatpush1.bf16.msra.mxu0 0
    %1120 = vmatprep.subr.bf16.mxu0 0
    %1121 = vmatpush1.bf16.msra.mxu0 0
    %1122 = vmatprep.subr.bf16.mxu0 0
    %1123 = vmatpush1.bf16.msra.mxu0 0
    %1124 = vmatprep.subr.bf16.mxu0 0
    %1125 = vmatpush1.bf16.msra.mxu0 0
    %1126 = vmatprep.subr.bf16.mxu0 0
    %1127 = vmatpush1.bf16.msra.mxu0 0
    %1128 = vmatprep.subr.bf16.mxu0 0
    %1129 = vmatpush1.bf16.msra.mxu0 0
    %1130 = vmatprep.subr.bf16.mxu0 0
    %1131 = vmatpush1.bf16.msra.mxu0 0
    %1132 = vmatprep.subr.bf16.mxu0 0
    %1133 = vmatpush1.bf16.msra.mxu0 0
    %1134 = vmatprep.subr.bf16.mxu0 0
    %1135 = vmatpush1.bf16.msra.mxu0 0
    %1136 = vmatprep.subr.bf16.mxu0 0
    %1137 = vmatpush1.bf16.msra.mxu0 0
    %1138 = vmatprep.mubr.bf16.mxu0 0
    %1139 = vmatmul.mubr.bf16.gmra.mrb[0].mxu0 %v1052
    %v1140 = vpop.f32.mrb[0].mxu0
    %v1141 = vadd.f32 %v1098, %v1140
    %v1142 = vpop.f32.mrb[0].mxu0
    %v1143 = vadd.f32 %v1100, %v1142
    %v1144 = vpop.f32.mrb[0].mxu0
    %v1145 = vadd.f32 %v1102, %v1144
    %v1146 = vpop.f32.mrb[0].mxu0
    %v1147 = vadd.f32 %v1104, %v1146
    %1148 = vdwg.mxu0
    %1149 = vmatprep.subr.bf16.mxu0 0
    %1150 = vmatpush1.bf16.msra.mxu0 %v942
    %1151 = vmatprep.subr.bf16.mxu0 0
    %1152 = vmatpush1.bf16.msra.mxu0 %v945
    %1153 = vmatprep.subr.bf16.mxu0 0
    %1154 = vmatpush1.bf16.msra.mxu0 %v948
    %1155 = vmatprep.subr.bf16.mxu0 0
    %1156 = vmatpush1.bf16.msra.mxu0 %v951
    %1157 = vmatprep.subr.bf16.mxu0 0
    %1158 = vmatpush1.bf16.msra.mxu0 %v954
    %1159 = vmatprep.subr.bf16.mxu0 0
    %1160 = vmatpush1.bf16.msra.mxu0 %v957
    %1161 = vmatprep.subr.bf16.mxu0 0
    %1162 = vmatpush1.bf16.msra.mxu0 %v960
    %1163 = vmatprep.subr.bf16.mxu0 0
    %1164 = vmatpush1.bf16.msra.mxu0 %v963
    %1165 = vmatprep.subr.bf16.mxu0 0
    %1166 = vmatpush1.bf16.msra.mxu0 %v966
    %1167 = vmatprep.subr.bf16.mxu0 0
    %1168 = vmatpush1.bf16.msra.mxu0 %v969
    %1169 = vmatprep.subr.bf16.mxu0 0
    %1170 = vmatpush1.bf16.msra.mxu0 %v972
    %1171 = vmatprep.subr.bf16.mxu0 0
    %1172 = vmatpush1.bf16.msra.mxu0 %v975
    %1173 = vmatprep.subr.bf16.mxu0 0
    %1174 = vmatpush1.bf16.msra.mxu0 %v978
    %1175 = vmatprep.subr.bf16.mxu0 0
    %1176 = vmatpush1.bf16.msra.mxu0 %v981
    %1177 = vmatprep.subr.bf16.mxu0 0
    %1178 = vmatpush1.bf16.msra.mxu0 %v984
    %1179 = vmatprep.subr.bf16.mxu0 0
    %1180 = vmatpush1.bf16.msra.mxu0 %v987
    %1181 = vmatprep.mubr.bf16.mxu0 %v655
    %1182 = vmatmul.mubr.bf16.gmra.mrb[0].mxu0 %v654
    %v1183 = vpop.f32.mrb[0].mxu0
    %v1184 = vadd.f32 %v746, %v1183
    %v1185 = vpop.f32.mrb[0].mxu0
    %v1186 = vpop.f32.mrb[0].mxu0
    %v1187 = vadd.f32 %v746, %v1186
    %v1188 = vpop.f32.mrb[0].mxu0
    %1189 = vdwg.mxu0
    %1190 = vmatprep.subr.bf16.mxu0 0
    %1191 = vmatpush1.bf16.msra.mxu0 %v990
    %1192 = vmatprep.subr.bf16.mxu0 0
    %1193 = vmatpush1.bf16.msra.mxu0 %v993
    %1194 = vmatprep.subr.bf16.mxu0 0
    %1195 = vmatpush1.bf16.msra.mxu0 %v1061
    %1196 = vmatprep.subr.bf16.mxu0 0
    %1197 = vmatpush1.bf16.msra.mxu0 0
    %1198 = vmatprep.subr.bf16.mxu0 0
    %1199 = vmatpush1.bf16.msra.mxu0 0
    %1200 = vmatprep.subr.bf16.mxu0 0
    %1201 = vmatpush1.bf16.msra.mxu0 0
    %1202 = vmatprep.subr.bf16.mxu0 0
    %1203 = vmatpush1.bf16.msra.mxu0 0
    %1204 = vmatprep.subr.bf16.mxu0 0
    %1205 = vmatpush1.bf16.msra.mxu0 0
    %1206 = vmatprep.subr.bf16.mxu0 0
    %1207 = vmatpush1.bf16.msra.mxu0 0
    %1208 = vmatprep.subr.bf16.mxu0 0
    %1209 = vmatpush1.bf16.msra.mxu0 0
    %1210 = vmatprep.subr.bf16.mxu0 0
    %1211 = vmatpush1.bf16.msra.mxu0 0
    %1212 = vmatprep.subr.bf16.mxu0 0
    %1213 = vmatpush1.bf16.msra.mxu0 0
    %1214 = vmatprep.subr.bf16.mxu0 0
    %1215 = vmatpush1.bf16.msra.mxu0 0
    %1216 = vmatprep.subr.bf16.mxu0 0
    %1217 = vmatpush1.bf16.msra.mxu0 0
    %1218 = vmatprep.subr.bf16.mxu0 0
    %1219 = vmatpush1.bf16.msra.mxu0 0
    %1220 = vmatprep.subr.bf16.mxu0 0
    %1221 = vmatpush1.bf16.msra.mxu0 0
    %1222 = vmatprep.mubr.bf16.mxu0 0
    %1223 = vmatmul.mubr.bf16.gmra.mrb[0].mxu0 %v1052
    %v1224 = vpop.f32.mrb[0].mxu0
    %v1225 = vadd.f32 %v1184, %v1224
    %v1226 = vpop.f32.mrb[0].mxu0
    %v1227 = vpop.f32.mrb[0].mxu0
    %v1228 = vadd.f32 %v1187, %v1227
    %v1229 = vpop.f32.mrb[0].mxu0
    %1230 = vdwg.mxu0
    %1231 = vst [vmem:[#allocation8] sm:$0xff] %v1141
    %1232 = vst [vmem:[#allocation8 + $0x8] sm:$0xff] %v1143
    %1233 = vst.msk [vmem:[#allocation8 + $0x10] sm:$0xff] %vm466, %v1225
    %1234 = vst [vmem:[#allocation8 + $0x18] sm:$0xff] %v1145
    %1235 = vst [vmem:[#allocation8 + $0x20] sm:$0xff] %v1147
    %1236 = vst.msk [vmem:[#allocation8 + $0x28] sm:$0xff] %vm466, %v1228
    // Predicated region
    $region34: #{tpu_custom_call.1} parent=1 // pred_check
      _
    $region35: #{tpu_custom_call.1} parent=1 // pred_check_branch
      %1238 = sbr.rel (0) target = $region37
    $region36: #{tpu_custom_call.1} parent=1 // pred_region
      %s1240 = ssub.s32 768, 768
      %1241 = vsyncadd [#allocation4], %s1240
      %s1242 = sshll.u32 [#allocation8], 4
      %s1243 = int_to_ptr.vmem [resolvable:$true] %s1242
      %1248 = dma.vmem_to_hbm [thread:$0]  %s1243, 768, %s5, [#allocation4], 384, 384, 24
    $region37: #{tpu_custom_call.1} parent=1 // pred_fallthru
      _
    // Predicated region
    $region38: #{tpu_custom_call.1} parent=1 // pred_check
      _
    $region39: #{tpu_custom_call.1} parent=1 // pred_check_branch
      %1250 = sbr.rel (0) target = $region41
    $region40: #{tpu_custom_call.1} parent=1 // pred_region
      %1251 = dma.done [#allocation4], 768
    $region41: #{tpu_custom_call.1} parent=1 // pred_fallthru
      _
    %1252 = vsyncpa [#allocation3], 1
    %1253 = vsyncpa [#allocation6], 1
    %1254 = vsyncpa [#allocation4], 1

</llo_original>
